<compile_context>
chip_gen: v7x
topology: tpu7x:2x2x1
jax: 0.10.0
libtpu: 0.0.40
codegen_flags: <defaults>
</compile_context>

<pallas_src>
import functools

import jax
import jax.numpy as jnp
from jax.experimental import pallas as pl
from jax.experimental.pallas import tpu as pltpu


def _semihard_kernel(alpha, beta, tm, n,
                     x_ref, xt_ref, t_row_ref, t_col_ref, out_ref):
    blk = pl.program_id(0)

    xb = x_ref[...]                                    # (TM, D) f32 row block
    xb16 = xb.astype(jnp.bfloat16)
    xt = xt_ref[...]                                   # (D, N)  bf16, all rows transposed

    # sim[blk] = x[blk] @ x.T  (MXU, bf16 operands, f32 accumulation)
    sim = jnp.dot(xb16, xt, preferred_element_type=jnp.float32)    # (TM, N) f32

    t_row = t_row_ref[...]                             # (1, N)  int32 column labels
    t_col = t_col_ref[...]                             # (TM, 1) int32 row-block labels
    same = t_col == t_row                              # same-label mask (incl. diag)

    rid = jax.lax.broadcasted_iota(jnp.int32, (tm, n), 0) + blk * tm   # global row id
    cid = jax.lax.broadcasted_iota(jnp.int32, (tm, n), 1)
    diag = rid == cid

    pos_mask = same & jnp.logical_not(diag)            # positives: same label, off-diag
    neg_mask = jnp.logical_not(same)                   # negatives: different label

    NEG = jnp.float32(-1e30)
    POS = jnp.float32(1e30)
    # per-row largest positive similarity  (== sorted pos_pair_[-1])
    max_pos = jnp.max(jnp.where(pos_mask, sim, NEG), axis=1, keepdims=True)   # (TM,1)
    # per-row smallest negative similarity (== sorted neg_pair_[0])
    min_neg = jnp.min(jnp.where(neg_mask, sim, POS), axis=1, keepdims=True)   # (TM,1)

    base = jnp.float32(0.5)
    sel_pos = pos_mask & (sim > min_neg)               # pos_pair_ > neg_pair_[0]
    sel_neg = neg_mask & (sim < max_pos)               # neg_pair_ < pos_pair_[-1]

    # Single EUP exp per element; masks (disjoint) pick the right branch after.
    coef = jnp.where(sel_pos, jnp.float32(-beta), jnp.float32(alpha))
    e = jnp.exp(coef * (sim - base))
    pos_s = jnp.sum(jnp.where(sel_pos, e, 0.0), axis=1, keepdims=True)        # (TM,1)
    neg_s = jnp.sum(jnp.where(sel_neg, e, 0.0), axis=1, keepdims=True)        # (TM,1)

    # log1p(0) == 0, so no extra gating is needed for empty selections.
    pos_loss = (2.0 / beta) * jnp.log1p(pos_s)
    neg_loss = (2.0 / alpha) * jnp.log1p(neg_s)
    loss_part = jnp.sum(pos_loss + neg_loss, axis=(0, 1), keepdims=True)      # (1,1)

    # Partial sums for mean positive / negative similarity:
    #   sum(sim * pos_mask) = sum(sim * same) - trace(sim)
    #   sum(sim * neg_mask) = sum(sim)        - sum(sim * same)
    sum_all = jnp.sum(sim, axis=(0, 1), keepdims=True)
    sum_same = jnp.sum(jnp.where(same, sim, 0.0), axis=(0, 1), keepdims=True)
    xf = xb16.astype(jnp.float32)
    trace_part = jnp.sum(xf * xf, axis=(0, 1), keepdims=True)  # sum_i x_i . x_i (block rows)

    # Pack the four partials into this block's lane-dense (1, 8, 128) slab.
    lane = jax.lax.broadcasted_iota(jnp.int32, (1, 8, 128), 2)
    packed = (jnp.where(lane == 0, loss_part, 0.0)
              + jnp.where(lane == 1, sum_all, 0.0)
              + jnp.where(lane == 2, sum_same, 0.0)
              + jnp.where(lane == 3, trace_part, 0.0))
    out_ref[...] = packed


def semi_hard_loss(inputs, targets, *, alpha=40.0, beta=2.0, block_rows=None):
    """JAX/Pallas equivalent of SemiHardLoss.forward -> (loss, prec, pos_d, neg_d)."""
    n, d = inputs.shape
    x = inputs.astype(jnp.float32)
    tgt = targets.astype(jnp.int32)

    if block_rows is None:
        # Largest row tile that divides N and respects the (8, 128) layout;
        # modest cap keeps the (TM, N) slab + temporaries inside v7x's VMEM.
        block_rows = next((c for c in (128, 64, 32, 16, 8) if n % c == 0), n)
    tm = int(block_rows)
    assert n % tm == 0, "block_rows must divide the batch size"
    num_blocks = n // tm

    xt = x.T.astype(jnp.bfloat16)                      # one-time XLA transpose, (D, N)
    t_row = tgt.reshape(1, n)
    t_col = tgt.reshape(n, 1)

    kern = functools.partial(_semihard_kernel, float(alpha), float(beta), tm, n)
    parts = pl.pallas_call(
        kern,
        grid=(num_blocks,),
        out_shape=jax.ShapeDtypeStruct((num_blocks, 8, 128), jnp.float32),
        in_specs=[
            pl.BlockSpec((tm, d), lambda i: (i, 0)),   # x row block (f32, cast in-kernel)
            pl.BlockSpec((d, n), lambda i: (0, 0)),    # x.T, resident across grid steps
            pl.BlockSpec((1, n), lambda i: (0, 0)),    # labels as row (resident)
            pl.BlockSpec((tm, 1), lambda i: (i, 0)),   # labels of this row block
        ],
        out_specs=pl.BlockSpec((1, 8, 128), lambda i: (i, 0, 0)),
        compiler_params=pltpu.CompilerParams(
            dimension_semantics=("parallel",),
            vmem_limit_bytes=64 * 1024 * 1024),
    )(x, xt, t_row, t_col)

    # Tiny cross-block reduction + scalar post-processing in plain JAX.
    s = jnp.sum(parts[:, 0, :], axis=0)                # (128,)
    loss_sum, sum_all, sum_same, trace = s[0], s[1], s[2], s[3]

    loss = loss_sum / n

    # Pair counts from label statistics (cheap int compare in XLA, not in-kernel).
    same_cnt = jnp.sum((tgt[:, None] == tgt[None, :]).astype(jnp.float32))
    pos_cnt = same_cnt - n
    neg_cnt = float(n * n) - same_cnt
    pos_sum = sum_same - trace
    neg_sum = sum_all - sum_same
    pos_d = jnp.where(pos_cnt > 0, pos_sum / jnp.maximum(pos_cnt, 1.0), 0.0)
    neg_d = jnp.where(neg_cnt > 0, neg_sum / jnp.maximum(neg_cnt, 1.0), 0.0)

    prec = 0.0  # `c` is never incremented in the reference module
    return loss, prec, pos_d, neg_d


if __name__ == "__main__":
    key = jax.random.PRNGKey(0)
    n, d = 16, 32                                       # N samples, D-dim embeddings
    # Balanced labels (4 classes x 4 instances), as the reference code assumes.
    targets = jnp.repeat(jnp.arange(4, dtype=jnp.int32), 4)
    x = jax.random.normal(key, (n, d), dtype=jnp.float32)
    x = x / jnp.linalg.norm(x, axis=1, keepdims=True)   # L2-normalized embeddings

    loss, prec, pos_d, neg_d = semi_hard_loss(x, targets, alpha=40.0, beta=2.0,
                                              block_rows=8)   # 2 grid steps
    jax.block_until_ready((loss, pos_d, neg_d))
    print("KERNEL_OK")
</pallas_src>

<mosaic_0001>
module attributes {stable_mosaic.version = 11 : i64} {
  func.func @_semihard_kernel(%arg0: i32, %arg1: memref<8x32xf32, #tpu.memory_space<vmem>>, %arg2: memref<32x16xbf16, #tpu.memory_space<vmem>>, %arg3: memref<1x16xi32, #tpu.memory_space<vmem>>, %arg4: memref<8x1xi32, #tpu.memory_space<vmem>>, %arg5: memref<1x8x128xf32, #tpu.memory_space<vmem>>) attributes {dimension_semantics = [#tpu.dimension_semantics<parallel>], iteration_bounds = array<i64: 2>, scalar_prefetch = 0 : i64, scratch_operands = 0 : i64, tpu.core_type = #tpu.core_type<tc>, window_params = [{transform_indices = @transform_0, window_bounds = array<i64: 8, 32>}, {pipeline_mode = #tpu.pipeline_mode<synchronous>, transform_indices = @transform_1, window_bounds = array<i64: 32, 16>}, {pipeline_mode = #tpu.pipeline_mode<synchronous>, transform_indices = @transform_2, window_bounds = array<i64: 1, 16>}, {transform_indices = @transform_3, window_bounds = array<i64: 8, 1>}, {transform_indices = @transform_4, window_bounds = array<i64: 1, 8, 128>}]} {
    %c0 = arith.constant 0 : index
    %c0_0 = arith.constant 0 : index
    %0 = vector.load %arg1[%c0, %c0_0] : memref<8x32xf32, #tpu.memory_space<vmem>>, vector<8x32xf32>
    %1 = arith.truncf %0 : vector<8x32xf32> to vector<8x32xbf16>
    %c0_1 = arith.constant 0 : index
    %c0_2 = arith.constant 0 : index
    %2 = vector.load %arg2[%c0_1, %c0_2] : memref<32x16xbf16, #tpu.memory_space<vmem>>, vector<32x16xbf16>
    %cst = arith.constant dense<0.000000e+00> : vector<8x16xf32>
    %3 = tpu.matmul %1, %2, %cst {dimension_numbers = #tpu.dot_dimension_numbers<[1], [0], [0], [1], [0, 0, 1, 1], [], []>} : vector<8x32xbf16>, vector<32x16xbf16>, vector<8x16xf32> -> vector<8x16xf32>
    %c0_3 = arith.constant 0 : index
    %c0_4 = arith.constant 0 : index
    %4 = vector.load %arg3[%c0_3, %c0_4] : memref<1x16xi32, #tpu.memory_space<vmem>>, vector<1x16xi32>
    %c0_5 = arith.constant 0 : index
    %c0_6 = arith.constant 0 : index
    %5 = vector.load %arg4[%c0_5, %c0_6] : memref<8x1xi32, #tpu.memory_space<vmem>>, vector<8x1xi32>
    %6 = vector.broadcast %5 : vector<8x1xi32> to vector<8x16xi32>
    %7 = vector.broadcast %4 : vector<1x16xi32> to vector<8x16xi32>
    %8 = arith.cmpi eq, %6, %7 : vector<8x16xi32>
    %9 = tpu.iota {dimensions = array<i32: 0>} : vector<8x16xi32>
    %c8_i32 = arith.constant 8 : i32
    %10 = arith.muli %arg0, %c8_i32 : i32
    %11 = vector.broadcast %10 : i32 to vector<8x16xi32>
    %12 = arith.addi %9, %11 : vector<8x16xi32>
    %13 = tpu.iota {dimensions = array<i32: 1>} : vector<8x16xi32>
    %14 = arith.cmpi eq, %12, %13 : vector<8x16xi32>
    %cst_7 = arith.constant dense<true> : vector<8x16xi1>
    %15 = arith.xori %14, %cst_7 : vector<8x16xi1>
    %16 = arith.andi %8, %15 : vector<8x16xi1>
    %cst_8 = arith.constant dense<true> : vector<8x16xi1>
    %17 = arith.xori %8, %cst_8 : vector<8x16xi1>
    %cst_9 = arith.constant -1.000000e+30 : f32
    %18 = vector.broadcast %cst_9 : f32 to vector<8x16xf32>
    %19 = arith.select %16, %3, %18 : vector<8x16xi1>, vector<8x16xf32>
    %cst_10 = arith.constant dense<0xFF800000> : vector<8xf32>
    %20 = vector.multi_reduction <maximumf>, %19, %cst_10 [1] : vector<8x16xf32> to vector<8xf32>
    %21 = vector.shape_cast %20 : vector<8xf32> to vector<8x1xf32>
    %cst_11 = arith.constant 1.000000e+30 : f32
    %22 = vector.broadcast %cst_11 : f32 to vector<8x16xf32>
    %23 = arith.select %17, %3, %22 : vector<8x16xi1>, vector<8x16xf32>
    %cst_12 = arith.constant dense<0x7F800000> : vector<8xf32>
    %24 = vector.multi_reduction <minimumf>, %23, %cst_12 [1] : vector<8x16xf32> to vector<8xf32>
    %25 = vector.shape_cast %24 : vector<8xf32> to vector<8x1xf32>
    %26 = vector.broadcast %25 : vector<8x1xf32> to vector<8x16xf32>
    %27 = arith.cmpf ogt, %3, %26 : vector<8x16xf32>
    %28 = arith.andi %16, %27 : vector<8x16xi1>
    %29 = vector.broadcast %21 : vector<8x1xf32> to vector<8x16xf32>
    %30 = arith.cmpf olt, %3, %29 : vector<8x16xf32>
    %31 = arith.andi %17, %30 : vector<8x16xi1>
    %cst_13 = arith.constant -2.000000e+00 : f32
    %cst_14 = arith.constant 4.000000e+01 : f32
    %32 = vector.broadcast %cst_13 : f32 to vector<8x16xf32>
    %33 = vector.broadcast %cst_14 : f32 to vector<8x16xf32>
    %34 = arith.select %28, %32, %33 : vector<8x16xi1>, vector<8x16xf32>
    %cst_15 = arith.constant 5.000000e-01 : f32
    %35 = vector.broadcast %cst_15 : f32 to vector<8x16xf32>
    %36 = arith.subf %3, %35 : vector<8x16xf32>
    %37 = arith.mulf %34, %36 : vector<8x16xf32>
    %38 = math.exp %37 : vector<8x16xf32>
    %cst_16 = arith.constant 0.000000e+00 : f32
    %39 = vector.broadcast %cst_16 : f32 to vector<8x16xf32>
    %40 = arith.select %28, %38, %39 : vector<8x16xi1>, vector<8x16xf32>
    %cst_17 = arith.constant dense<0.000000e+00> : vector<8xf32>
    %41 = vector.multi_reduction <add>, %40, %cst_17 [1] : vector<8x16xf32> to vector<8xf32>
    %42 = vector.shape_cast %41 : vector<8xf32> to vector<8x1xf32>
    %cst_18 = arith.constant 0.000000e+00 : f32
    %43 = vector.broadcast %cst_18 : f32 to vector<8x16xf32>
    %44 = arith.select %31, %38, %43 : vector<8x16xi1>, vector<8x16xf32>
    %cst_19 = arith.constant dense<0.000000e+00> : vector<8xf32>
    %45 = vector.multi_reduction <add>, %44, %cst_19 [1] : vector<8x16xf32> to vector<8xf32>
    %46 = vector.shape_cast %45 : vector<8xf32> to vector<8x1xf32>
    %47 = math.log1p %42 : vector<8x1xf32>
    %cst_20 = arith.constant 1.000000e+00 : f32
    %48 = vector.broadcast %cst_20 : f32 to vector<8x1xf32>
    %49 = arith.mulf %48, %47 : vector<8x1xf32>
    %50 = math.log1p %46 : vector<8x1xf32>
    %cst_21 = arith.constant 5.000000e-02 : f32
    %51 = vector.broadcast %cst_21 : f32 to vector<8x1xf32>
    %52 = arith.mulf %51, %50 : vector<8x1xf32>
    %53 = arith.addf %49, %52 : vector<8x1xf32>
    %54 = vector.shape_cast %53 : vector<8x1xf32> to vector<1x8x1xf32>
    %cst_22 = arith.constant dense<0.000000e+00> : vector<1xf32>
    %55 = vector.multi_reduction <add>, %54, %cst_22 [1, 2] : vector<1x8x1xf32> to vector<1xf32>
    %56 = vector.shape_cast %55 : vector<1xf32> to vector<1x1x1xf32>
    %57 = vector.extract %56[0, 0, 0] : f32 from vector<1x1x1xf32>
    %58 = vector.broadcast %57 : f32 to vector<1x1xf32>
    %59 = vector.shape_cast %3 : vector<8x16xf32> to vector<1x8x16xf32>
    %cst_23 = arith.constant dense<0.000000e+00> : vector<1xf32>
    %60 = vector.multi_reduction <add>, %59, %cst_23 [1, 2] : vector<1x8x16xf32> to vector<1xf32>
    %61 = vector.shape_cast %60 : vector<1xf32> to vector<1x1x1xf32>
    %62 = vector.extract %61[0, 0, 0] : f32 from vector<1x1x1xf32>
    %63 = vector.broadcast %62 : f32 to vector<1x1xf32>
    %cst_24 = arith.constant 0.000000e+00 : f32
    %64 = vector.broadcast %cst_24 : f32 to vector<8x16xf32>
    %65 = arith.select %8, %3, %64 : vector<8x16xi1>, vector<8x16xf32>
    %66 = vector.shape_cast %65 : vector<8x16xf32> to vector<1x8x16xf32>
    %cst_25 = arith.constant dense<0.000000e+00> : vector<1xf32>
    %67 = vector.multi_reduction <add>, %66, %cst_25 [1, 2] : vector<1x8x16xf32> to vector<1xf32>
    %68 = vector.shape_cast %67 : vector<1xf32> to vector<1x1x1xf32>
    %69 = vector.extract %68[0, 0, 0] : f32 from vector<1x1x1xf32>
    %70 = vector.broadcast %69 : f32 to vector<1x1xf32>
    %71 = arith.extf %1 : vector<8x32xbf16> to vector<8x32xf32>
    %72 = arith.mulf %71, %71 : vector<8x32xf32>
    %73 = vector.shape_cast %72 : vector<8x32xf32> to vector<1x8x32xf32>
    %cst_26 = arith.constant dense<0.000000e+00> : vector<1xf32>
    %74 = vector.multi_reduction <add>, %73, %cst_26 [1, 2] : vector<1x8x32xf32> to vector<1xf32>
    %75 = vector.shape_cast %74 : vector<1xf32> to vector<1x1x1xf32>
    %76 = vector.extract %75[0, 0, 0] : f32 from vector<1x1x1xf32>
    %77 = vector.broadcast %76 : f32 to vector<1x1xf32>
    %78 = tpu.iota {dimensions = array<i32: 2>} : vector<1x8x128xi32>
    %c0_i32 = arith.constant 0 : i32
    %79 = vector.broadcast %c0_i32 : i32 to vector<1x8x128xi32>
    %80 = arith.cmpi eq, %78, %79 : vector<1x8x128xi32>
    %cst_27 = arith.constant 0.000000e+00 : f32
    %81 = vector.shape_cast %58 : vector<1x1xf32> to vector<1x1x1xf32>
    %82 = vector.broadcast %81 : vector<1x1x1xf32> to vector<1x8x128xf32>
    %83 = vector.broadcast %cst_27 : f32 to vector<1x8x128xf32>
    %84 = arith.select %80, %82, %83 : vector<1x8x128xi1>, vector<1x8x128xf32>
    %c1_i32 = arith.constant 1 : i32
    %85 = vector.broadcast %c1_i32 : i32 to vector<1x8x128xi32>
    %86 = arith.cmpi eq, %78, %85 : vector<1x8x128xi32>
    %cst_28 = arith.constant 0.000000e+00 : f32
    %87 = vector.shape_cast %63 : vector<1x1xf32> to vector<1x1x1xf32>
    %88 = vector.broadcast %87 : vector<1x1x1xf32> to vector<1x8x128xf32>
    %89 = vector.broadcast %cst_28 : f32 to vector<1x8x128xf32>
    %90 = arith.select %86, %88, %89 : vector<1x8x128xi1>, vector<1x8x128xf32>
    %91 = arith.addf %84, %90 : vector<1x8x128xf32>
    %c2_i32 = arith.constant 2 : i32
    %92 = vector.broadcast %c2_i32 : i32 to vector<1x8x128xi32>
    %93 = arith.cmpi eq, %78, %92 : vector<1x8x128xi32>
    %cst_29 = arith.constant 0.000000e+00 : f32
    %94 = vector.shape_cast %70 : vector<1x1xf32> to vector<1x1x1xf32>
    %95 = vector.broadcast %94 : vector<1x1x1xf32> to vector<1x8x128xf32>
    %96 = vector.broadcast %cst_29 : f32 to vector<1x8x128xf32>
    %97 = arith.select %93, %95, %96 : vector<1x8x128xi1>, vector<1x8x128xf32>
    %98 = arith.addf %91, %97 : vector<1x8x128xf32>
    %c3_i32 = arith.constant 3 : i32
    %99 = vector.broadcast %c3_i32 : i32 to vector<1x8x128xi32>
    %100 = arith.cmpi eq, %78, %99 : vector<1x8x128xi32>
    %cst_30 = arith.constant 0.000000e+00 : f32
    %101 = vector.shape_cast %77 : vector<1x1xf32> to vector<1x1x1xf32>
    %102 = vector.broadcast %101 : vector<1x1x1xf32> to vector<1x8x128xf32>
    %103 = vector.broadcast %cst_30 : f32 to vector<1x8x128xf32>
    %104 = arith.select %100, %102, %103 : vector<1x8x128xi1>, vector<1x8x128xf32>
    %105 = arith.addf %98, %104 : vector<1x8x128xf32>
    %c0_31 = arith.constant 0 : index
    %c0_32 = arith.constant 0 : index
    %c0_33 = arith.constant 0 : index
    %106 = vector.load %arg5[%c0_31, %c0_32, %c0_33] : memref<1x8x128xf32, #tpu.memory_space<vmem>>, vector<1x8x128xf32>
    tpu.vector_store %arg5[%c0_31, %c0_32, %c0_33], %105 {strides = array<i32>} : memref<1x8x128xf32, #tpu.memory_space<vmem>>, vector<1x8x128xf32>,
    return
  }
  func.func @transform_0(%arg0: i32) -> (i32, i32) {
    %c0_i32 = arith.constant 0 : i32
    %c0_i32_0 = arith.constant 0 : i32
    return %arg0, %c0_i32 : i32, i32
  }
  func.func @transform_1(%arg0: i32) -> (i32, i32) {
    %c0_i32 = arith.constant 0 : i32
    %c0_i32_0 = arith.constant 0 : i32
    %c0_i32_1 = arith.constant 0 : i32
    return %c0_i32, %c0_i32_0 : i32, i32
  }
  func.func @transform_2(%arg0: i32) -> (i32, i32) {
    %c0_i32 = arith.constant 0 : i32
    %c0_i32_0 = arith.constant 0 : i32
    %c0_i32_1 = arith.constant 0 : i32
    return %c0_i32, %c0_i32_0 : i32, i32
  }
  func.func @transform_3(%arg0: i32) -> (i32, i32) {
    %c0_i32 = arith.constant 0 : i32
    %c0_i32_0 = arith.constant 0 : i32
    return %arg0, %c0_i32 : i32, i32
  }
  func.func @transform_4(%arg0: i32) -> (i32, i32, i32) {
    %c0_i32 = arith.constant 0 : i32
    %c0_i32_0 = arith.constant 0 : i32
    %c0_i32_1 = arith.constant 0 : i32
    return %arg0, %c0_i32, %c0_i32_0 : i32, i32, i32
  }
}

</mosaic_0001>

<llo_original>
// kernel: tpu_custom_call.1
$region0: #{tpu_custom_call.1}
  #allocation0 [shape = 'u32[]', space=smem, size = 0x4, offset = 0x4, fixed_abs, tag = 'smem constant byte address 0x4 - core index']
  #allocation1 [shape = 'u32[144,128]{1,0:T(1,128)}', space=vmem, size = 0x12000, scoped, tag = 'internal scratch']
  %s0 = inlined_call_operand.hbm [shape: f32[16,32], index: 0, kind: input, shape index: {}]
  %s1 = inlined_call_operand.hbm [shape: bf16[32,16], index: 1, kind: input, shape index: {}]
  %s2 = inlined_call_operand.hbm [shape: s32[1,16], index: 2, kind: input, shape index: {}]
  %s3 = inlined_call_operand.hbm [shape: s32[16,1], index: 3, kind: input, shape index: {}]
  %s4 = inlined_call_operand.hbm [shape: f32[2,8,128], index: 4, kind: output, shape index: {}]
  %s5 = sld [smem:[#allocation0]]
  $region65: #{tpu_custom_call.1} parent=0
    _
  %s7 = ssub.s32 1, %s5
  %s8 = scalar_select 0, %s7, %s5
  $region1: #{tpu_custom_call.1} parent=0
    #allocation2 [shape = 'u8[8192]{0}', space=vmem, size = 0x2000, scoped, tag = 'input window, operand 0']
    #allocation3 [shape = 's32[2]{0}', space=sflag, size = 0x8, scoped, tag = 'scoped memory for tpu_custom_call.1']
    #allocation4 [shape = 's32[2]{0}', space=sflag, size = 0x8, scoped, tag = 'scoped memory for tpu_custom_call.1']
    #allocation5 [shape = 'u8[8192]{0}', space=vmem, size = 0x2000, scoped, tag = 'input window, operand 1, single buffered']
    #allocation6 [shape = 's32[1]{0}', space=sflag, size = 0x4, scoped, tag = 'scoped memory for tpu_custom_call.1']
    #allocation7 [shape = 'u8[512]{0}', space=vmem, size = 0x400, scoped, tag = 'input window, operand 2, single buffered']
    #allocation8 [shape = 'u8[8192]{0}', space=vmem, size = 0x2000, scoped, tag = 'input window, operand 3']
    #allocation9 [shape = 's32[2]{0}', space=sflag, size = 0x8, scoped, tag = 'scoped memory for tpu_custom_call.1']
    #allocation10 [shape = 'u8[8192]{0}', space=vmem, size = 0x2000, scoped, tag = 'output window, operand 0']
    %9 = vsyncpa [#allocation3], 0
    %s10 = scalar_lea.sflag [#allocation3], 1
    %11 = vsyncpa %s10, 0
    %12 = vsyncpa [#allocation6], 0
    %13 = vsyncpa [#allocation9], 0
    %s14 = scalar_lea.sflag [#allocation9], 1
    %15 = vsyncpa %s14, 0
    %16 = vsyncpa [#allocation4], 0
    %s17 = scalar_lea.sflag [#allocation4], 1
    %18 = vsyncpa %s17, 0
    loop: start=0, step=1, limit=4
    $region2: #{tpu_custom_call.1} parent=1 // loop_pre_header
      _
    $region3: #{tpu_custom_call.1} parent=1 // loop_header
      %s20 = sphi 0, %s24
      %p21 = scmp.ge.s32.totalorder %s20, 4
      %s30 = sphi 0, %s32
      %s33 = sphi 0, %s30
      %s34 = sphi 0, %s33
      %s50 = sphi 0, %s34
      %s54 = sphi 0, %s54
      %s56 = sphi 0, %s54
      %s57 = sphi 0, %s56
      %s71 = sphi 0, %s57
      %s75 = sphi 0, %s75
      %s77 = sphi 0, %s75
      %s78 = sphi 0, %s77
      %s92 = sphi 0, %s78
      %s98 = sphi 0, %s100
      %s101 = sphi 0, %s98
      %s102 = sphi 0, %s101
      %s118 = sphi 0, %s102
      %s124 = sphi 0, %s126
      %s127 = sphi 0, %s124
      %s128 = sphi 0, %s127
      %s144 = sphi 0, %s128
    $region4: #{tpu_custom_call.1} parent=1 // loop_header_branch
      %23 = sbr.rel (%p21) target = $region8
    $region5: #{tpu_custom_call.1} parent=1 // loop_body
      %s25 = ssub.s32 %s20, 1
      %s26 = ssub.s32 %s20, 2
      %s27 = sadd.s32 %s20, 1
      %s28 = ssub.s32 %s20, %s27
      %p29 = scmp.eq.s32.totalorder %s28, 0
      %s31 = sadd.s32 %s30, 1
      %s32 = scalar_select %p29, %s30, %s31
      %p35 = pneg %p29
      %p36 = scmp.eq.s32.totalorder %s20, 1
      %p37 = por %p35, %p36
      %p38 = scmp.ne.s32.totalorder %s30, %s33
      %p39 = scmp.eq.s32.totalorder %s20, 0
      %p40 = por %p38, %p39
      %p41 = scmp.ne.s32.totalorder %s30, %s33
      %p42 = scmp.eq.s32.totalorder %s25, 1
      %p43 = por %p41, %p42
      %p44 = scmp.ne.s32.totalorder %s33, %s34
      %p45 = scmp.eq.s32.totalorder %s25, 0
      %p46 = por %p44, %p45
      %p47 = scmp.ne.s32.totalorder %s33, %s34
      %p48 = scmp.eq.s32.totalorder %s26, 1
      %p49 = por %p47, %p48
      %p51 = scmp.ne.s32.totalorder %s34, %s50
      %p52 = scmp.eq.s32.totalorder %s26, 0
      %p53 = por %p51, %p52
      %s55 = sadd.s32 %s54, 1
      %p58 = scmp.eq.s32.totalorder %s20, 1
      %p59 = scmp.ne.s32.totalorder %s54, %s56
      %p60 = scmp.eq.s32.totalorder %s20, 0
      %p61 = por %p59, %p60
      %p62 = scmp.ne.s32.totalorder %s54, %s56
      %p63 = scmp.eq.s32.totalorder %s25, 1
      %p64 = por %p62, %p63
      %p65 = scmp.ne.s32.totalorder %s56, %s57
      %p66 = scmp.eq.s32.totalorder %s25, 0
      %p67 = por %p65, %p66
      %p68 = scmp.ne.s32.totalorder %s56, %s57
      %p69 = scmp.eq.s32.totalorder %s26, 1
      %p70 = por %p68, %p69
      %p72 = scmp.ne.s32.totalorder %s57, %s71
      %p73 = scmp.eq.s32.totalorder %s26, 0
      %p74 = por %p72, %p73
      %s76 = sadd.s32 %s75, 1
      %p79 = scmp.eq.s32.totalorder %s20, 1
      %p80 = scmp.ne.s32.totalorder %s75, %s77
      %p81 = scmp.eq.s32.totalorder %s20, 0
      %p82 = por %p80, %p81
      %p83 = scmp.ne.s32.totalorder %s75, %s77
      %p84 = scmp.eq.s32.totalorder %s25, 1
      %p85 = por %p83, %p84
      %p86 = scmp.ne.s32.totalorder %s77, %s78
      %p87 = scmp.eq.s32.totalorder %s25, 0
      %p88 = por %p86, %p87
      %p89 = scmp.ne.s32.totalorder %s77, %s78
      %p90 = scmp.eq.s32.totalorder %s26, 1
      %p91 = por %p89, %p90
      %p93 = scmp.ne.s32.totalorder %s78, %s92
      %p94 = scmp.eq.s32.totalorder %s26, 0
      %p95 = por %p93, %p94
      %s96 = ssub.s32 %s20, %s27
      %p97 = scmp.eq.s32.totalorder %s96, 0
      %s99 = sadd.s32 %s98, 1
      %s100 = scalar_select %p97, %s98, %s99
      %p103 = pneg %p97
      %p104 = scmp.eq.s32.totalorder %s20, 1
      %p105 = por %p103, %p104
      %p106 = scmp.ne.s32.totalorder %s98, %s101
      %p107 = scmp.eq.s32.totalorder %s20, 0
      %p108 = por %p106, %p107
      %p109 = scmp.ne.s32.totalorder %s98, %s101
      %p110 = scmp.eq.s32.totalorder %s25, 1
      %p111 = por %p109, %p110
      %p112 = scmp.ne.s32.totalorder %s101, %s102
      %p113 = scmp.eq.s32.totalorder %s25, 0
      %p114 = por %p112, %p113
      %p115 = scmp.ne.s32.totalorder %s101, %s102
      %p116 = scmp.eq.s32.totalorder %s26, 1
      %p117 = por %p115, %p116
      %p119 = scmp.ne.s32.totalorder %s102, %s118
      %p120 = scmp.eq.s32.totalorder %s26, 0
      %p121 = por %p119, %p120
      %s122 = ssub.s32 %s20, %s27
      %p123 = scmp.eq.s32.totalorder %s122, 0
      %s125 = sadd.s32 %s124, 1
      %s126 = scalar_select %p123, %s124, %s125
      %p129 = pneg %p123
      %p130 = scmp.eq.s32.totalorder %s20, 1
      %p131 = por %p129, %p130
      %p132 = scmp.ne.s32.totalorder %s124, %s127
      %p133 = scmp.eq.s32.totalorder %s20, 0
      %p134 = por %p132, %p133
      %p135 = scmp.ne.s32.totalorder %s124, %s127
      %p136 = scmp.eq.s32.totalorder %s25, 1
      %p137 = por %p135, %p136
      %p138 = scmp.ne.s32.totalorder %s127, %s128
      %p139 = scmp.eq.s32.totalorder %s25, 0
      %p140 = por %p138, %p139
      %p141 = scmp.ne.s32.totalorder %s127, %s128
      %p142 = scmp.eq.s32.totalorder %s26, 1
      %p143 = por %p141, %p142
      %p145 = scmp.ne.s32.totalorder %s128, %s144
      %p146 = scmp.eq.s32.totalorder %s26, 0
      %p147 = por %p145, %p146
      %p148 = scmp.le.s32.totalorder 1, %s20
      %p149 = scmp.lt.s32.totalorder %s20, 3
      %p150 = pnand %p148, %p149
      %p151 = pneg %p150
      // Predicated region
      $region9: #{tpu_custom_call.1} parent=5 // pred_check
        _
      $region10: #{tpu_custom_call.1} parent=5 // pred_check_branch
        %153 = sbr.rel (%p150) target = $region12
      $region11: #{tpu_custom_call.1} parent=5 // pred_region
        %s154 = ssub.s32 %s20, 1
        // Predicated region
        $region13: #{tpu_custom_call.1} parent=11 // pred_check
          %p155 = pneg %p67
        $region14: #{tpu_custom_call.1} parent=11 // pred_check_branch
          %157 = sbr.rel (%p155) target = $region16
        $region15: #{tpu_custom_call.1} parent=11 // pred_region
          %s159 = ssub.s32 256, 256
          %160 = vsyncadd [#allocation6], %s159
          %s161 = sshll.u32 [#allocation5], 4
          %s162 = int_to_ptr.vmem [resolvable:$true] %s161
          %167 = dma.hbm_to_vmem [thread:$0]  %s1, 256, %s162, [#allocation6], 64, 64, 4
        $region16: #{tpu_custom_call.1} parent=11 // pred_fallthru
          _
        // Predicated region
        $region17: #{tpu_custom_call.1} parent=11 // pred_check
          %p168 = pneg %p88
        $region18: #{tpu_custom_call.1} parent=11 // pred_check_branch
          %170 = sbr.rel (%p168) target = $region20
        $region19: #{tpu_custom_call.1} parent=11 // pred_region
          %s172 = ssub.s32 16, 16
          %173 = vsyncadd [#allocation6], %s172
          %s175 = sshll.u32 [#allocation7], 4
          %s176 = int_to_ptr.vmem [resolvable:$true] %s175
          %178 = dma.hbm_to_vmem [thread:$0]  %s2, 16, %s176, [#allocation6]
        $region20: #{tpu_custom_call.1} parent=11 // pred_fallthru
          _
      $region12: #{tpu_custom_call.1} parent=5 // pred_fallthru
        _
      %p179 = scmp.lt.s32.totalorder %s20, 2
      // Predicated region
      $region21: #{tpu_custom_call.1} parent=5 // pred_check
        %p180 = pneg %p179
      $region22: #{tpu_custom_call.1} parent=5 // pred_check_branch
        %182 = sbr.rel (%p180) target = $region24
      $region23: #{tpu_custom_call.1} parent=5 // pred_region
        // Predicated region
        $region25: #{tpu_custom_call.1} parent=23 // pred_check
          %p183 = pneg %p40
        $region26: #{tpu_custom_call.1} parent=23 // pred_check_branch
          %185 = sbr.rel (%p183) target = $region28
        $region27: #{tpu_custom_call.1} parent=23 // pred_region
          %s186 = sand.u32 %s30, 1
          %s187 = scalar_lea.sflag [#allocation3], %s186
          %s188 = sand.u32 %s30, 1
          %s189 = smul.addr %s188, 8
          %s190 = scalar_lea.vmem [#allocation2], %s189
          %s192 = ssub.s32 128, 128
          %193 = vsyncadd %s187, %s192
          %s194 = smul.addr %s20, 128
          %s195 = scalar_lea.hbm %s0, %s194
          %s197 = sshll.u32 %s190, 4
          %s198 = int_to_ptr.vmem [resolvable:$true] %s197
          %200 = dma.hbm_to_vmem [thread:$0]  %s195, 128, %s198, %s187
        $region28: #{tpu_custom_call.1} parent=23 // pred_fallthru
          _
        // Predicated region
        $region29: #{tpu_custom_call.1} parent=23 // pred_check
          %p201 = pneg %p108
        $region30: #{tpu_custom_call.1} parent=23 // pred_check_branch
          %203 = sbr.rel (%p201) target = $region32
        $region31: #{tpu_custom_call.1} parent=23 // pred_region
          %s204 = sand.u32 %s98, 1
          %s205 = scalar_lea.sflag [#allocation9], %s204
          %s206 = sand.u32 %s98, 1
          %s207 = smul.addr %s206, 8
          %s208 = scalar_lea.vmem [#allocation8], %s207
          %s210 = ssub.s32 128, 128
          %211 = vsyncadd %s205, %s210
          %s212 = smul.addr %s20, 128
          %s213 = scalar_lea.hbm %s3, %s212
          %s215 = sshll.u32 %s208, 4
          %s216 = int_to_ptr.vmem [resolvable:$true] %s215
          %218 = dma.hbm_to_vmem [thread:$0]  %s213, 128, %s216, %s205
        $region32: #{tpu_custom_call.1} parent=23 // pred_fallthru
          _
      $region24: #{tpu_custom_call.1} parent=5 // pred_fallthru
        _
      %p219 = scmp.le.s32.totalorder 1, %s20
      %p220 = scmp.lt.s32.totalorder %s20, 3
      %p221 = pnand %p219, %p220
      %p222 = pneg %p221
      // Predicated region
      $region33: #{tpu_custom_call.1} parent=5 // pred_check
        _
      $region34: #{tpu_custom_call.1} parent=5 // pred_check_branch
        %224 = sbr.rel (%p221) target = $region36
      $region35: #{tpu_custom_call.1} parent=5 // pred_region
        %s225 = ssub.s32 %s20, 1
        %s226 = sand.u32 %s33, 1
        %s227 = scalar_lea.sflag [#allocation3], %s226
        %s228 = sand.u32 %s33, 1
        %s229 = smul.addr %s228, 8
        %s230 = scalar_lea.vmem [#allocation2], %s229
        // Predicated region
        $region37: #{tpu_custom_call.1} parent=35 // pred_check
          %p231 = pneg %p46
        $region38: #{tpu_custom_call.1} parent=35 // pred_check_branch
          %233 = sbr.rel (%p231) target = $region40
        $region39: #{tpu_custom_call.1} parent=35 // pred_region
          %234 = dma.done %s227, 128
        $region40: #{tpu_custom_call.1} parent=35 // pred_fallthru
          _
        // Predicated region
        $region41: #{tpu_custom_call.1} parent=35 // pred_check
          %p235 = pneg %p67
        $region42: #{tpu_custom_call.1} parent=35 // pred_check_branch
          %237 = sbr.rel (%p235) target = $region44
        $region43: #{tpu_custom_call.1} parent=35 // pred_region
          %238 = dma.done [#allocation6], 256
        $region44: #{tpu_custom_call.1} parent=35 // pred_fallthru
          _
        // Predicated region
        $region45: #{tpu_custom_call.1} parent=35 // pred_check
          %p239 = pneg %p88
        $region46: #{tpu_custom_call.1} parent=35 // pred_check_branch
          %241 = sbr.rel (%p239) target = $region48
        $region47: #{tpu_custom_call.1} parent=35 // pred_region
          %242 = dma.done [#allocation6], 16
        $region48: #{tpu_custom_call.1} parent=35 // pred_fallthru
          _
        %s243 = sand.u32 %s101, 1
        %s244 = scalar_lea.sflag [#allocation9], %s243
        %s245 = sand.u32 %s101, 1
        %s246 = smul.addr %s245, 8
        %s247 = scalar_lea.vmem [#allocation8], %s246
        // Predicated region
        $region49: #{tpu_custom_call.1} parent=35 // pred_check
          %p248 = pneg %p114
        $region50: #{tpu_custom_call.1} parent=35 // pred_check_branch
          %250 = sbr.rel (%p248) target = $region52
        $region51: #{tpu_custom_call.1} parent=35 // pred_region
          %251 = dma.done %s244, 128
        $region52: #{tpu_custom_call.1} parent=35 // pred_fallthru
          _
        %s252 = sand.u32 %s33, 1
        %s253 = scalar_lea.sflag [#allocation3], %s252
        %s254 = sand.u32 %s33, 1
        %s255 = smul.addr %s254, 8
        %s256 = scalar_lea.vmem [#allocation2], %s255
        %p257 = pneg %p46
        %p258 = pneg %p43
        %p259 = pneg %p67
        %p260 = pneg %p64
        %p261 = pneg %p88
        %p262 = pneg %p85
        %s263 = sand.u32 %s101, 1
        %s264 = scalar_lea.sflag [#allocation9], %s263
        %s265 = sand.u32 %s101, 1
        %s266 = smul.addr %s265, 8
        %s267 = scalar_lea.vmem [#allocation8], %s266
        %p268 = pneg %p114
        %p269 = pneg %p111
        %p270 = pneg %p140
        %p271 = pneg %p137
        %s272 = sand.u32 %s127, 1
        %s273 = scalar_lea.sflag [#allocation4], %s272
        %s274 = sand.u32 %s127, 1
        %s275 = smul.addr %s274, 8
        %s276 = scalar_lea.vmem [#allocation10], %s275
        %v278 = vld [vmem:[%s230] sm:$0xff]
        %v279 = vpack.c.bf16 %v278, %v278
        %v280 = vld [vmem:[#allocation5] sm:$0xf]
        %v281 = vld [vmem:[#allocation5 + $0x4] sm:$0xf]
        %v282 = vld [vmem:[#allocation5 + $0x8] sm:$0xf]
        %v283 = vld [vmem:[#allocation5 + $0xc] sm:$0xf]
        %v288 = vunpack.c.l.b16 %v280
        %v289 = vunpack.c.l.b16 %v281
        %v290 = vunpack.c.l.b16 %v282
        %v291 = vunpack.c.l.b16 %v283
        %v292 = vpack.c.b16 %v289, %v288
        %v293 = vpack.c.b16 %v291, %v290
        %vm296 = vcmask 261120
        %v298 = vsel %vm296, %v279, 0
        %300 = vmatprep.subr.bf16.mxu0 0
        %301 = vmatpush1.bf16.msra.mxu0 %v292
        %302 = vmatprep.subr.bf16.mxu0 0
        %303 = vmatpush1.bf16.msra.mxu0 %v293
        %304 = vmatprep.subr.bf16.mxu0 0
        %305 = vmatpush1.bf16.msra.mxu0 0
        %306 = vmatprep.subr.bf16.mxu0 0
        %307 = vmatpush1.bf16.msra.mxu0 0
        %308 = vmatprep.subr.bf16.mxu0 0
        %309 = vmatpush1.bf16.msra.mxu0 0
        %310 = vmatprep.subr.bf16.mxu0 0
        %311 = vmatpush1.bf16.msra.mxu0 0
        %312 = vmatprep.subr.bf16.mxu0 0
        %313 = vmatpush1.bf16.msra.mxu0 0
        %314 = vmatprep.subr.bf16.mxu0 0
        %315 = vmatpush1.bf16.msra.mxu0 0
        %316 = vmatprep.subr.bf16.mxu0 0
        %317 = vmatpush1.bf16.msra.mxu0 0
        %318 = vmatprep.subr.bf16.mxu0 0
        %319 = vmatpush1.bf16.msra.mxu0 0
        %320 = vmatprep.subr.bf16.mxu0 0
        %321 = vmatpush1.bf16.msra.mxu0 0
        %322 = vmatprep.subr.bf16.mxu0 0
        %323 = vmatpush1.bf16.msra.mxu0 0
        %324 = vmatprep.subr.bf16.mxu0 0
        %325 = vmatpush1.bf16.msra.mxu0 0
        %326 = vmatprep.subr.bf16.mxu0 0
        %327 = vmatpush1.bf16.msra.mxu0 0
        %328 = vmatprep.subr.bf16.mxu0 0
        %329 = vmatpush1.bf16.msra.mxu0 0
        %330 = vmatprep.subr.bf16.mxu0 0
        %331 = vmatpush1.bf16.msra.mxu0 0
        %332 = vmatprep.mubr.bf16.mxu0 0
        %333 = vmatmul.mubr.bf16.gmra.mrb[0].mxu0 %v298
        %v334 = vpop.f32.mrb[0].mxu0
        %v335 = vadd.f32 0.0, %v334
        %v336 = vpop.f32.mrb[0].mxu0
        %v337 = vpop.f32.mrb[0].mxu0
        %v338 = vpop.f32.mrb[0].mxu0
        %339 = vdwg.mxu0
        %v340 = vld [vmem:[#allocation7] sm:$0x1]
        %v341 = vld [vmem:[%s247] sm:$0xff]
        %342 = vset.pattern.permute.xlu0 0
        %343 = vperm.xlu0 %342, %v341
        %v344 = vpop.permute.xlu0 %343
        %v345 = vlaneseq
        %v346 = vshrl.u32 %v345, 7
        %v347 = vsub.s32 0, %v346
        %v348 = vrot.slane %v340, %v347
        %vm349 = vcmp.eq.s32.totalorder %v344, %v348
        %v350 = vlaneseq
        %v351 = vshrl.u32 %v350, 7
        %s352 = smul.u32 %s25, 8
        %v353 = vstv %s352
        %v354 = vadd.s32 %v351, %v353
        %v355 = vlaneseq
        %v356 = vand.u32 %v355, 127
        %vm357 = vcmp.eq.s32.totalorder %v354, %v356
        %vm358 = vmxor %vm357, 1
        %vm359 = vmand %vm349, %vm358
        %vm360 = vmxor %vm349, 1
        %v361 = vsel %vm359, %v335, -1e+30
        %vm362 = vcmask 130048
        %v363 = vsel %vm362, %v361, -inf
        %364 = vmax.xlane.f32.xlu0 %v363
        %v365 = vpop.xlane.xlu0 %364
        %v366 = vsel %vm360, %v335, 1e+30
        %v367 = vsel %vm362, %v366, inf
        %368 = vmin.xlane.f32.xlu0 %v367
        %v369 = vpop.xlane.xlu0 %368
        %vm370 = vcmp.gt.f32.partialorder %v335, %v369
        %vm371 = vmand %vm359, %vm370
        %vm372 = vcmp.lt.f32.partialorder %v335, %v365
        %vm373 = vmand %vm360, %vm372
        %v374 = vsel %vm371, -2.0, 40.0
        %v375 = vsub.f32 %v335, 0.5
        %v376 = vmul.f32 %v374, %v375
        %v377 = vmul.f32 %v376, 1.442695
        %v378 = vpow.pop %v377
        %v379 = vsel %vm371, %v378, 0.0
        %v380 = vsel %vm362, %v379, 0.0
        %381 = vadd.xlane.f32.xlu0 %v380
        %v382 = vpop.xlane.xlu0 %381
        %v383 = vsel %vm373, %v378, 0.0
        %v384 = vsel %vm362, %v383, 0.0
        %385 = vadd.xlane.f32.xlu0 %v384
        %v386 = vpop.xlane.xlu0 %385
        %v387 = vadd.f32 %v382, 1.0
        %v388 = vlog2.pop %v387
        %v389 = vmul.f32 %v388, 0.6931472
        %v390 = vmul.f32 -0.5, %v382
        %v391 = vadd.f32 %v390, 1.0
        %v392 = vmul.f32 %v391, %v382
        %v393 = vand.u32 2147483647, %v382
        %vm394 = vcmp.lt.f32.partialorder %v393, 0.0004427343
        %v395 = vsel %vm394, %v392, %v389
        %v396 = vadd.f32 %v386, 1.0
        %v397 = vlog2.pop %v396
        %v398 = vmul.f32 %v397, 0.6931472
        %v399 = vmul.f32 -0.5, %v386
        %v400 = vadd.f32 %v399, 1.0
        %v401 = vmul.f32 %v400, %v386
        %v402 = vand.u32 2147483647, %v386
        %vm403 = vcmp.lt.f32.partialorder %v402, 0.0004427343
        %v404 = vsel %vm403, %v401, %v398
        %v405 = vmul.f32 %v404, 0.05
        %v406 = vadd.f32 %v395, %v405
        %vm407 = vcmask 7168
        %v408 = vsel %vm407, %v406, 0.0
        %409 = vadd.xlane.f32.xlu0 %v408
        %v410 = vpop.xlane.xlu0 %409
        %v411 = vrot.slane %v410, 4
        %v412 = vadd.f32 %v410, %v411
        %v413 = vrot.slane %v412, 2
        %v414 = vadd.f32 %v412, %v413
        %v415 = vrot.slane %v414, 1
        %v416 = vadd.f32 %v414, %v415
        %s417 = vtos %v416
        %v418 = vsel %vm362, %v335, 0.0
        %419 = vadd.xlane.f32.xlu0 %v418
        %v420 = vpop.xlane.xlu0 %419
        %v421 = vrot.slane %v420, 4
        %v422 = vadd.f32 %v420, %v421
        %v423 = vrot.slane %v422, 2
        %v424 = vadd.f32 %v422, %v423
        %v425 = vrot.slane %v424, 1
        %v426 = vadd.f32 %v424, %v425
        %s427 = vtos %v426
        %v428 = vsel %vm349, %v335, 0.0
        %v429 = vsel %vm362, %v428, 0.0
        %430 = vadd.xlane.f32.xlu0 %v429
        %v431 = vpop.xlane.xlu0 %430
        %v432 = vrot.slane %v431, 4
        %v433 = vadd.f32 %v431, %v432
        %v434 = vrot.slane %v433, 2
        %v435 = vadd.f32 %v433, %v434
        %v436 = vrot.slane %v435, 1
        %v437 = vadd.f32 %v435, %v436
        %s438 = vtos %v437
        %v439 = vunpack.c.l.bf16 %v279
        %v440 = vmul.f32 %v439, %v439
        %v441 = vsel %vm296, %v440, 0.0
        %442 = vadd.xlane.f32.xlu0 %v441
        %v443 = vpop.xlane.xlu0 %442
        %v444 = vrot.slane %v443, 4
        %v445 = vadd.f32 %v443, %v444
        %v446 = vrot.slane %v445, 2
        %v447 = vadd.f32 %v445, %v446
        %v448 = vrot.slane %v447, 1
        %v449 = vadd.f32 %v447, %v448
        %s450 = vtos %v449
        %vm451 = vcmp.eq.s32.totalorder %v356, 0
        %v452 = vstv %s417
        %v453 = vsel %vm451, %v452, 0.0
        %vm454 = vcmp.eq.s32.totalorder %v356, 1
        %v455 = vstv %s427
        %v456 = vsel %vm454, %v455, 0.0
        %v457 = vadd.f32 %v453, %v456
        %vm458 = vcmp.eq.s32.totalorder %v356, 2
        %v459 = vstv %s438
        %v460 = vsel %vm458, %v459, 0.0
        %v461 = vadd.f32 %v457, %v460
        %vm462 = vcmp.eq.s32.totalorder %v356, 3
        %v463 = vstv %s450
        %v464 = vsel %vm462, %v463, 0.0
        %v465 = vadd.f32 %v461, %v464
        %466 = vst [vmem:[%s276] sm:$0xff] %v465
        %s467 = sand.u32 %s127, 1
        %s468 = scalar_lea.sflag [#allocation4], %s467
        %s469 = sand.u32 %s127, 1
        %s470 = smul.addr %s469, 8
        %s471 = scalar_lea.vmem [#allocation10], %s470
        // Predicated region
        $region53: #{tpu_custom_call.1} parent=35 // pred_check
          %p472 = pneg %p137
        $region54: #{tpu_custom_call.1} parent=35 // pred_check_branch
          %474 = sbr.rel (%p472) target = $region56
        $region55: #{tpu_custom_call.1} parent=35 // pred_region
          %s476 = ssub.s32 128, 128
          %477 = vsyncadd %s468, %s476
          %s478 = smul.addr %s25, 128
          %s479 = scalar_lea.hbm %s4, %s478
          %s481 = sshll.u32 %s471, 4
          %s482 = int_to_ptr.vmem [resolvable:$true] %s481
          %484 = dma.vmem_to_hbm [thread:$0]  %s482, 128, %s479, %s468
        $region56: #{tpu_custom_call.1} parent=35 // pred_fallthru
          _
      $region36: #{tpu_custom_call.1} parent=5 // pred_fallthru
        _
      %p485 = scmp.le.s32.totalorder 2, %s20
      // Predicated region
      $region57: #{tpu_custom_call.1} parent=5 // pred_check
        %p486 = pneg %p485
      $region58: #{tpu_custom_call.1} parent=5 // pred_check_branch
        %488 = sbr.rel (%p486) target = $region60
      $region59: #{tpu_custom_call.1} parent=5 // pred_region
        %s489 = ssub.s32 %s20, 2
        // Predicated region
        $region61: #{tpu_custom_call.1} parent=59 // pred_check
          %p490 = pneg %p143
        $region62: #{tpu_custom_call.1} parent=59 // pred_check_branch
          %492 = sbr.rel (%p490) target = $region64
        $region63: #{tpu_custom_call.1} parent=59 // pred_region
          %s493 = sand.u32 %s128, 1
          %s494 = scalar_lea.sflag [#allocation4], %s493
          %s495 = sand.u32 %s128, 1
          %s496 = smul.addr %s495, 8
          %s497 = scalar_lea.vmem [#allocation10], %s496
          %498 = dma.done %s494, 128
        $region64: #{tpu_custom_call.1} parent=59 // pred_fallthru
          _
      $region60: #{tpu_custom_call.1} parent=5 // pred_fallthru
        _
    $region6: #{tpu_custom_call.1} parent=1 // loop_footer
      %s24 = sadd.s32 1, %s20
    $region7: #{tpu_custom_call.1} parent=1 // loop_footer_branch
      %19 = sbr.rel target = $region3
    $region8: #{tpu_custom_call.1} parent=1 // loop_exit
      _
    %499 = vsyncpa [#allocation3], 1
    %s500 = scalar_lea.sflag [#allocation3], 1
    %501 = vsyncpa %s500, 1
    %502 = vsyncpa [#allocation6], 1
    %503 = vsyncpa [#allocation9], 1
    %s504 = scalar_lea.sflag [#allocation9], 1
    %505 = vsyncpa %s504, 1
    %506 = vsyncpa [#allocation4], 1
    %s507 = scalar_lea.sflag [#allocation4], 1
    %508 = vsyncpa %s507, 1

</llo_original>
